<compile_context>
chip_gen: v7x
topology: tpu7x:2x2x1
jax: 0.10.0
libtpu: 0.0.40
codegen_flags: <defaults>
</compile_context>

<pallas_src>
from typing import NamedTuple

import jax
import jax.numpy as jnp
from jax.experimental import pallas as pl
from jax.experimental.pallas import tpu as pltpu


_SQRT_HALF = 0.7071067811865476


def _round_up(x: int, m: int) -> int:
    return ((x + m - 1) // m) * m


def _hw_vmem_bytes() -> int:
    """Per-TensorCore VMEM capacity (falls back to the v7x 64 MiB minimum)."""
    try:
        info = pltpu.get_tpu_info()
        v = getattr(info, "vmem_capacity_bytes", None)
        if v:
            return int(v)
    except Exception:
        pass
    return 64 * 1024 * 1024


class _FFNPlan(NamedTuple):
    Dp: int          # padded feature dim (lanes)
    Hp: int          # padded hidden dim
    tm: int          # max token tile (capped per call by actual M)
    tk: int          # hidden tile
    num_sub: int     # sub-chunks of tk inside the kernel body
    vmem_limit: int  # scoped VMEM limit to request


def _plan(dim: int, hidden: int, *, x_itemsize: int, w_itemsize: int,
          out_itemsize: int) -> _FFNPlan:
    vmem = _hw_vmem_bytes()
    big_vmem = vmem >= 96 * 1024 * 1024          # v5e/v6e (128 MiB) vs v7x (64 MiB)
    tm = 1024 if big_vmem else 512               # generation-tuned M tile
    tk = 512
    budget = int(vmem * 0.80)

    Dp = _round_up(dim, 256)                     # lane-dense + 256-wide MXU aligned
    tk = min(tk, _round_up(hidden, 256))
    Hp = _round_up(hidden, tk)

    def est(tm_, tk_):
        sub_k_ = tk_ // (2 if tk_ >= 512 else 1)
        return (2 * tm_ * Dp * x_itemsize        # x tile (double-buffered)
                + 2 * Dp * tk_ * w_itemsize      # W1 tile (double-buffered)
                + 2 * tk_ * Dp * w_itemsize      # W2 tile (double-buffered)
                + 2 * tm_ * Dp * out_itemsize    # out tile (double-buffered)
                + Hp * 4 + 2 * Dp * 4            # resident b1 + b2
                + tm_ * Dp * 4                   # f32 accumulator scratch
                + tm_ * Dp * 4                   # matmul-2 result temporary
                + 2 * tm_ * sub_k_ * 4)          # h / GELU temporaries

    # Shrink tm first (weights are the stream we want to keep big), tk last.
    while est(tm, tk) > budget and tm > 256:
        tm = max(256, tm // 2)
    while est(tm, tk) > budget and tk > 256:
        tk = max(256, tk // 2)
        Hp = _round_up(hidden, tk)

    num_sub = 2 if tk >= 512 else 1
    vmem_limit = int(min(vmem * 0.90,
                         max(est(tm, tk) * 1.4, 32 * 1024 * 1024)))
    return _FFNPlan(Dp=Dp, Hp=Hp, tm=tm, tk=tk, num_sub=num_sub,
                    vmem_limit=vmem_limit)


def _make_ffn_kernel(num_sub: int, sub_k: int):
    def kernel(x_ref, w1_ref, b1_ref, w2_ref, b2_ref, o_ref, acc_ref):
        # x_ref:  (tm, Dp)   w1_ref: (Dp, tk)   b1_ref: (G, tk)  [resident]
        # w2_ref: (tk, Dp)   b2_ref: (1, Dp)    [resident]       o_ref: (tm, Dp)
        # acc_ref: (tm, Dp) f32, resident across the k (hidden) grid axis.
        k = pl.program_id(1)

        @pl.when(k == 0)
        def _():
            acc_ref[...] = jnp.zeros_like(acc_ref)

        x_tile = x_ref[...]
        # Resident bias: pick the row for this hidden tile (no per-step DMA).
        b1_row = b1_ref[pl.ds(k, 1), :].astype(jnp.float32)        # (1, tk)

        # Sub-chunk the hidden tile: matmul-2 of chunk j overlaps the
        # VPU/EUP erf-GELU chain of chunk j+1 (separate issue slots).
        for j in range(num_sub):
            lo = j * sub_k
            hi = lo + sub_k
            # First Linear (MXU, bf16 operands, f32 accumulation).
            h = jnp.dot(x_tile, w1_ref[:, lo:hi],
                        preferred_element_type=jnp.float32)
            h = h + b1_row[:, lo:hi]
            # Exact (erf) GELU, matching torch.nn.GELU() default, in f32.
            h = 0.5 * h * (1.0 + jax.lax.erf(h * jnp.float32(_SQRT_HALF)))
            # (Dropout: identity in eval/inference mode.)
            # Second Linear: accumulate over hidden tiles.
            acc_ref[...] += jnp.dot(h.astype(w2_ref.dtype), w2_ref[lo:hi, :],
                                    preferred_element_type=jnp.float32)

        @pl.when(k == pl.num_programs(1) - 1)
        def _():
            out = acc_ref[...] + b2_ref[...].astype(jnp.float32)
            # (Dropout: identity in eval/inference mode.)
            o_ref[...] = out.astype(o_ref.dtype)

    return kernel


def make_feed_forward(w1, b1, w2, b2, *, compute_dtype=jnp.bfloat16):
    """Returns a jitted apply(x) for FeedForward.

    Pads + casts the weights ONCE here (outside the per-call hot path) and
    derives generation-specific tiles from the hardware VMEM capacity.
    w1: (dim, hidden), w2: (hidden, dim); x: [..., dim] -> [..., dim].
    """
    dim, hidden = w1.shape
    assert w2.shape == (hidden, dim)
    wdt = jnp.dtype(compute_dtype)

    plan = _plan(dim, hidden, x_itemsize=wdt.itemsize, w_itemsize=wdt.itemsize,
                 out_itemsize=4)  # worst-case f32 output for the budget
    Dp, Hp, tk = plan.Dp, plan.Hp, plan.tk
    G = Hp // tk

    def _pad2(a, rows, cols):
        pr, pc = rows - a.shape[0], cols - a.shape[1]
        if pr or pc:
            a = jnp.pad(a, ((0, pr), (0, pc)))
        return a

    # Pre-pad / pre-cast weights once.  Zero padding is exact for this op
    # (GELU(0)=0; zero weight rows/cols contribute 0).  Biases stay f32.
    w1p = _pad2(w1, Dp, Hp).astype(compute_dtype)
    w2p = _pad2(w2, Hp, Dp).astype(compute_dtype)
    b1p = _pad2(b1.reshape(1, hidden), 1, Hp).astype(jnp.float32).reshape(G, tk)
    b2p = _pad2(b2.reshape(1, dim), 1, Dp).astype(jnp.float32)

    kernel = _make_ffn_kernel(plan.num_sub, tk // plan.num_sub)

    @jax.jit
    def apply(x):
        orig_shape = x.shape
        assert orig_shape[-1] == dim
        M = 1
        for s in orig_shape[:-1]:
            M *= s
        x2d = x.reshape(M, dim)

        tm = min(plan.tm, _round_up(M, 16))
        Mp = _round_up(M, tm)

        xp = x2d
        if xp.dtype != wdt:
            xp = xp.astype(compute_dtype)         # MXU-native activation stream
        if Mp != M or Dp != dim:                  # skip pads when aligned
            xp = jnp.pad(xp, ((0, Mp - M), (0, Dp - dim)))

        grid = (Mp // tm, Hp // tk)
        num_m_tiles = grid[0]
        bx = wdt.itemsize
        bo = jnp.dtype(x.dtype).itemsize

        cost = pl.CostEstimate(
            flops=4 * Mp * Dp * Hp,                       # two matmuls
            transcendentals=Mp * Hp,                      # erf
            bytes_accessed=(Mp * Dp * bx                  # x read
                            # weights are re-streamed once per M tile:
                            + num_m_tiles * (w1p.size + w2p.size) * wdt.itemsize
                            + b1p.size * 4 + b2p.size * 4
                            + Mp * Dp * bo),              # output write
        )

        out2d = pl.pallas_call(
            kernel,
            out_shape=jax.ShapeDtypeStruct((Mp, Dp), x.dtype),
            grid_spec=pltpu.PrefetchScalarGridSpec(
                num_scalar_prefetch=0,
                grid=grid,
                in_specs=[
                    pl.BlockSpec((tm, Dp), lambda i, k: (i, 0)),   # x tile
                    pl.BlockSpec((Dp, tk), lambda i, k: (0, k)),   # W1 stream over hidden
                    pl.BlockSpec((G, tk), lambda i, k: (0, 0)),    # b1 (resident)
                    pl.BlockSpec((tk, Dp), lambda i, k: (k, 0)),   # W2 stream over hidden
                    pl.BlockSpec((1, Dp), lambda i, k: (0, 0)),    # b2 (resident)
                ],
                out_specs=pl.BlockSpec((tm, Dp), lambda i, k: (i, 0)),
                scratch_shapes=[pltpu.VMEM((tm, Dp), jnp.float32)],
            ),
            compiler_params=pltpu.CompilerParams(
                # M axis "parallel" -> megacore sharding on v7x (both cores
                # re-stream the weight tiles; hidden once tiles are compute-bound).
                dimension_semantics=("parallel", "arbitrary"),
                vmem_limit_bytes=plan.vmem_limit,
            ),
            cost_estimate=cost,
        )(xp, w1p, b1p, w2p, b2p)

        if Mp != M or Dp != dim:
            out2d = out2d[:M, :dim]
        return out2d.reshape(orig_shape)

    return apply


def feed_forward(x, w1, b1, w2, b2, *, compute_dtype=jnp.bfloat16):
    """One-shot convenience wrapper (prefer make_feed_forward to hoist prep)."""
    return make_feed_forward(w1, b1, w2, b2, compute_dtype=compute_dtype)(x)


def _init_linear(key, in_features, out_features, dtype=jnp.float32):
    """Deterministic init matching nn.Linear's uniform(-1/sqrt(in), 1/sqrt(in)).
    Stored as (in, out) so the kernel computes x @ W (== torch x @ weight.T)."""
    kw, kb = jax.random.split(key)
    bound = 1.0 / jnp.sqrt(jnp.float32(in_features))
    w = jax.random.uniform(kw, (in_features, out_features), dtype, -bound, bound)
    b = jax.random.uniform(kb, (out_features,), dtype, -bound, bound)
    return w, b


if __name__ == "__main__":
    key = jax.random.PRNGKey(0)
    k_x, k_l1, k_l2 = jax.random.split(key, 3)

    batch, seq, dim, hidden_dim = 2, 8, 16, 32
    dropout_rate = 0.1  # nn.Dropout is the identity in eval/inference mode

    x = jax.random.normal(k_x, (batch, seq, dim), dtype=jnp.float32)
    w1, b1 = _init_linear(k_l1, dim, hidden_dim)
    w2, b2 = _init_linear(k_l2, hidden_dim, dim)

    ffn = make_feed_forward(w1, b1, w2, b2, compute_dtype=jnp.bfloat16)
    out = jax.block_until_ready(ffn(x))

    # Reference with the SAME mixed precision as the kernel
    # (bf16 MXU operands, f32 accumulation / bias / GELU).
    def _bf16(a):
        return a.astype(jnp.bfloat16).astype(jnp.float32)

    h = _bf16(x.reshape(-1, dim)) @ _bf16(w1) + b1
    h = 0.5 * h * (1.0 + jax.lax.erf(h * _SQRT_HALF))
    ref = (_bf16(h) @ _bf16(w2) + b2).reshape(batch, seq, dim)
    assert jnp.allclose(out, ref, atol=1e-4, rtol=1e-4), \
        "mismatch vs mixed-precision reference"

    # Looser sanity check against the pure-f32 reference (bf16 weight streaming
    # introduces a small, expected numeric delta).
    h32 = x.reshape(-1, dim) @ w1 + b1
    h32 = 0.5 * h32 * (1.0 + jax.lax.erf(h32 * _SQRT_HALF))
    ref32 = (h32 @ w2 + b2).reshape(batch, seq, dim)
    assert jnp.allclose(out, ref32, atol=5e-2, rtol=5e-2), \
        "mismatch vs f32 reference"

    print("KERNEL_OK")
</pallas_src>

<mosaic_0001>
module attributes {stable_mosaic.version = 11 : i64} {
  func.func @kernel(%arg0: i32, %arg1: i32, %arg2: memref<16x256xbf16, #tpu.memory_space<vmem>>, %arg3: memref<256x256xbf16, #tpu.memory_space<vmem>>, %arg4: memref<1x256xf32, #tpu.memory_space<vmem>>, %arg5: memref<256x256xbf16, #tpu.memory_space<vmem>>, %arg6: memref<1x256xf32, #tpu.memory_space<vmem>>, %arg7: memref<16x256xf32, #tpu.memory_space<vmem>>, %arg8: memref<16x256xf32, #tpu.memory_space<vmem>>) attributes {dimension_semantics = [#tpu.dimension_semantics<parallel>, #tpu.dimension_semantics<arbitrary>], iteration_bounds = array<i64: 1, 1>, scalar_prefetch = 0 : i64, scratch_operands = 1 : i64, tpu.core_type = #tpu.core_type<tc>, window_params = [{transform_indices = @transform_0, window_bounds = array<i64: 16, 256>}, {transform_indices = @transform_1, window_bounds = array<i64: 256, 256>}, {pipeline_mode = #tpu.pipeline_mode<synchronous>, transform_indices = @transform_2, window_bounds = array<i64: 1, 256>}, {transform_indices = @transform_3, window_bounds = array<i64: 256, 256>}, {pipeline_mode = #tpu.pipeline_mode<synchronous>, transform_indices = @transform_4, window_bounds = array<i64: 1, 256>}, {transform_indices = @transform_5, window_bounds = array<i64: 16, 256>}]} {
    %c0_i32 = arith.constant 0 : i32
    %0 = arith.cmpi eq, %arg1, %c0_i32 : i32
    %1 = arith.extui %0 : i1 to i32
    %c0_i32_0 = arith.constant 0 : i32
    %2 = arith.cmpi ne, %1, %c0_i32_0 : i32
    scf.if %2 {
      %cst_17 = arith.constant 0.000000e+00 : f32
      %27 = vector.broadcast %cst_17 : f32 to vector<16x256xf32>
      %c0_18 = arith.constant 0 : index
      %c0_19 = arith.constant 0 : index
      %28 = vector.load %arg8[%c0_18, %c0_19] : memref<16x256xf32, #tpu.memory_space<vmem>>, vector<16x256xf32>
      tpu.vector_store %arg8[%c0_18, %c0_19], %27 {strides = array<i32>} : memref<16x256xf32, #tpu.memory_space<vmem>>, vector<16x256xf32>,
    } else {
    }
    %c0 = arith.constant 0 : index
    %c0_1 = arith.constant 0 : index
    %3 = vector.load %arg2[%c0, %c0_1] : memref<16x256xbf16, #tpu.memory_space<vmem>>, vector<16x256xbf16>
    %4 = arith.index_cast %arg1 : i32 to index
    %c0_2 = arith.constant 0 : index
    %5 = vector.load %arg4[%4, %c0_2] : memref<1x256xf32, #tpu.memory_space<vmem>>, vector<1x256xf32>
    %c0_3 = arith.constant 0 : index
    %c0_4 = arith.constant 0 : index
    %6 = vector.load %arg3[%c0_3, %c0_4] : memref<256x256xbf16, #tpu.memory_space<vmem>>, vector<256x256xbf16>
    %cst = arith.constant dense<0.000000e+00> : vector<16x256xf32>
    %7 = tpu.matmul %3, %6, %cst {dimension_numbers = #tpu.dot_dimension_numbers<[1], [0], [0], [1], [0, 0, 1, 1], [], []>} : vector<16x256xbf16>, vector<256x256xbf16>, vector<16x256xf32> -> vector<16x256xf32>
    %8 = vector.broadcast %5 : vector<1x256xf32> to vector<16x256xf32>
    %9 = arith.addf %7, %8 : vector<16x256xf32>
    %cst_5 = arith.constant 5.000000e-01 : f32
    %10 = vector.broadcast %cst_5 : f32 to vector<16x256xf32>
    %11 = arith.mulf %10, %9 : vector<16x256xf32>
    %cst_6 = arith.constant 0.707106769 : f32
    %12 = vector.broadcast %cst_6 : f32 to vector<16x256xf32>
    %13 = arith.mulf %9, %12 : vector<16x256xf32>
    %14 = math.erf %13 : vector<16x256xf32>
    %cst_7 = arith.constant 1.000000e+00 : f32
    %15 = vector.broadcast %cst_7 : f32 to vector<16x256xf32>
    %16 = arith.addf %15, %14 : vector<16x256xf32>
    %17 = arith.mulf %11, %16 : vector<16x256xf32>
    %c0_8 = arith.constant 0 : index
    %c0_9 = arith.constant 0 : index
    %18 = vector.load %arg8[%c0_8, %c0_9] : memref<16x256xf32, #tpu.memory_space<vmem>>, vector<16x256xf32>
    %19 = arith.truncf %17 : vector<16x256xf32> to vector<16x256xbf16>
    %c0_10 = arith.constant 0 : index
    %c0_11 = arith.constant 0 : index
    %20 = vector.load %arg5[%c0_10, %c0_11] : memref<256x256xbf16, #tpu.memory_space<vmem>>, vector<256x256xbf16>
    %cst_12 = arith.constant dense<0.000000e+00> : vector<16x256xf32>
    %21 = tpu.matmul %19, %20, %cst_12 {dimension_numbers = #tpu.dot_dimension_numbers<[1], [0], [0], [1], [0, 0, 1, 1], [], []>} : vector<16x256xbf16>, vector<256x256xbf16>, vector<16x256xf32> -> vector<16x256xf32>
    %22 = arith.addf %18, %21 : vector<16x256xf32>
    %c0_13 = arith.constant 0 : index
    %c0_14 = arith.constant 0 : index
    %23 = vector.load %arg8[%c0_13, %c0_14] : memref<16x256xf32, #tpu.memory_space<vmem>>, vector<16x256xf32>
    tpu.vector_store %arg8[%c0_13, %c0_14], %22 {strides = array<i32>} : memref<16x256xf32, #tpu.memory_space<vmem>>, vector<16x256xf32>,
    %c0_i32_15 = arith.constant 0 : i32
    %24 = arith.cmpi eq, %arg1, %c0_i32_15 : i32
    %25 = arith.extui %24 : i1 to i32
    %c0_i32_16 = arith.constant 0 : i32
    %26 = arith.cmpi ne, %25, %c0_i32_16 : i32
    scf.if %26 {
      %c0_17 = arith.constant 0 : index
      %c0_18 = arith.constant 0 : index
      %27 = vector.load %arg8[%c0_17, %c0_18] : memref<16x256xf32, #tpu.memory_space<vmem>>, vector<16x256xf32>
      %c0_19 = arith.constant 0 : index
      %c0_20 = arith.constant 0 : index
      %28 = vector.load %arg6[%c0_19, %c0_20] : memref<1x256xf32, #tpu.memory_space<vmem>>, vector<1x256xf32>
      %29 = vector.broadcast %28 : vector<1x256xf32> to vector<16x256xf32>
      %30 = arith.addf %27, %29 : vector<16x256xf32>
      %c0_21 = arith.constant 0 : index
      %c0_22 = arith.constant 0 : index
      %31 = vector.load %arg7[%c0_21, %c0_22] : memref<16x256xf32, #tpu.memory_space<vmem>>, vector<16x256xf32>
      tpu.vector_store %arg7[%c0_21, %c0_22], %30 {strides = array<i32>} : memref<16x256xf32, #tpu.memory_space<vmem>>, vector<16x256xf32>,
    } else {
    }
    return
  }
  func.func @transform_0(%arg0: i32, %arg1: i32) -> (i32, i32) {
    %c0_i32 = arith.constant 0 : i32
    %c0_i32_0 = arith.constant 0 : i32
    return %arg0, %c0_i32 : i32, i32
  }
  func.func @transform_1(%arg0: i32, %arg1: i32) -> (i32, i32) {
    %c0_i32 = arith.constant 0 : i32
    %c0_i32_0 = arith.constant 0 : i32
    return %c0_i32, %arg1 : i32, i32
  }
  func.func @transform_2(%arg0: i32, %arg1: i32) -> (i32, i32) {
    %c0_i32 = arith.constant 0 : i32
    %c0_i32_0 = arith.constant 0 : i32
    %c0_i32_1 = arith.constant 0 : i32
    return %c0_i32, %c0_i32_0 : i32, i32
  }
  func.func @transform_3(%arg0: i32, %arg1: i32) -> (i32, i32) {
    %c0_i32 = arith.constant 0 : i32
    %c0_i32_0 = arith.constant 0 : i32
    return %arg1, %c0_i32 : i32, i32
  }
  func.func @transform_4(%arg0: i32, %arg1: i32) -> (i32, i32) {
    %c0_i32 = arith.constant 0 : i32
    %c0_i32_0 = arith.constant 0 : i32
    %c0_i32_1 = arith.constant 0 : i32
    return %c0_i32, %c0_i32_0 : i32, i32
  }
  func.func @transform_5(%arg0: i32, %arg1: i32) -> (i32, i32) {
    %c0_i32 = arith.constant 0 : i32
    %c0_i32_0 = arith.constant 0 : i32
    return %arg0, %c0_i32 : i32, i32
  }
}

</mosaic_0001>

<llo_original>
// kernel: apply.1
$region0: #{apply.1}
  #allocation0 [shape = 'u32[]', space=smem, size = 0x4, offset = 0x4, fixed_abs, tag = 'smem constant byte address 0x4 - core index']
  #allocation1 [shape = 'u32[144,128]{1,0:T(1,128)}', space=vmem, size = 0x12000, scoped, tag = 'internal scratch']
  #allocation2 [shape = 'f32[16,256]{1,0:T(8,128)}', space=vmem, size = 0x4000, scoped, tag = 'scratch operand']
  %s0 = inlined_call_operand.vmem [shape: bf16[16,256], index: 0, kind: input, shape index: {}]
  %s1 = inlined_call_operand.vmem [shape: bf16[256,256], index: 1, kind: input, shape index: {}]
  %s2 = inlined_call_operand.vmem [shape: f32[1,256], index: 2, kind: input, shape index: {}]
  %s3 = inlined_call_operand.vmem [shape: bf16[256,256], index: 3, kind: input, shape index: {}]
  %s4 = inlined_call_operand.vmem [shape: f32[1,256], index: 4, kind: input, shape index: {}]
  %s5 = inlined_call_operand.vmem [shape: f32[16,256], index: 5, kind: output, shape index: {}]
  %s6 = sld [smem:[#allocation0]]
  $region38: #{apply.1} parent=0
    _
  %s8 = ssub.s32 1, %s6
  %s9 = scalar_select 0, %s8, %s6
  // Predicated region
  $region2: #{apply.1} parent=0 // pred_check
    _
  $region3: #{apply.1} parent=0 // pred_check_branch
    %11 = sbr.rel (0) target = $region5
  $region4: #{apply.1} parent=0 // pred_region
    _
  $region5: #{apply.1} parent=0 // pred_fallthru
    _
  // Predicated region
  $region6: #{apply.1} parent=0 // pred_check
    _
  $region7: #{apply.1} parent=0 // pred_check_branch
    %13 = sbr.rel (0) target = $region9
  $region8: #{apply.1} parent=0 // pred_region
    _
  $region9: #{apply.1} parent=0 // pred_fallthru
    _
  // Predicated region
  $region10: #{apply.1} parent=0 // pred_check
    _
  $region11: #{apply.1} parent=0 // pred_check_branch
    %15 = sbr.rel (0) target = $region13
  $region12: #{apply.1} parent=0 // pred_region
    _
  $region13: #{apply.1} parent=0 // pred_fallthru
    _
  // Predicated region
  $region14: #{apply.1} parent=0 // pred_check
    _
  $region15: #{apply.1} parent=0 // pred_check_branch
    %17 = sbr.rel (0) target = $region17
  $region16: #{apply.1} parent=0 // pred_region
    _
  $region17: #{apply.1} parent=0 // pred_fallthru
    _
  // Predicated region
  $region18: #{apply.1} parent=0 // pred_check
    _
  $region19: #{apply.1} parent=0 // pred_check_branch
    %19 = sbr.rel (0) target = $region21
  $region20: #{apply.1} parent=0 // pred_region
    _
  $region21: #{apply.1} parent=0 // pred_fallthru
    _
  %p20 = scmp.eq.s32.totalorder 0, 0
  // Predicated region
  $region22: #{apply.1} parent=0 // pred_check
    %p21 = pneg %p20
  $region23: #{apply.1} parent=0 // pred_check_branch
    %23 = sbr.rel (%p21) target = $region25
  $region24: #{apply.1} parent=0 // pred_region
    %24 = vst [vmem:[#allocation2] sm:$0xff] 0.0
    %25 = vst [vmem:[#allocation2 + $0x8] sm:$0xff] 0.0
    %26 = vst [vmem:[#allocation2 + $0x10] sm:$0xff] 0.0
    %27 = vst [vmem:[#allocation2 + $0x18] sm:$0xff] 0.0
  $region25: #{apply.1} parent=0 // pred_fallthru
    _
  %v28 = vld [vmem:[%s0] sm:$0xff]
  %v29 = vld [vmem:[%s0 + $0x8] sm:$0xff]
  %s30 = smul.u32 0, 2
  %s31 = scalar_lea.vmem %s2, %s30
  %v32 = vld [vmem:[%s31] sm:$0x3]
  %v33 = vld [vmem:[%s1] sm:$0xff]
  %v34 = vld [vmem:[%s1 + $0x8] sm:$0xff]
  %v35 = vld [vmem:[%s1 + $0x10] sm:$0xff]
  %v36 = vld [vmem:[%s1 + $0x18] sm:$0xff]
  %v37 = vld [vmem:[%s1 + $0x20] sm:$0xff]
  %v38 = vld [vmem:[%s1 + $0x28] sm:$0xff]
  %v39 = vld [vmem:[%s1 + $0x30] sm:$0xff]
  %v40 = vld [vmem:[%s1 + $0x38] sm:$0xff]
  %v41 = vld [vmem:[%s1 + $0x40] sm:$0xff]
  %v42 = vld [vmem:[%s1 + $0x48] sm:$0xff]
  %v43 = vld [vmem:[%s1 + $0x50] sm:$0xff]
  %v44 = vld [vmem:[%s1 + $0x58] sm:$0xff]
  %v45 = vld [vmem:[%s1 + $0x60] sm:$0xff]
  %v46 = vld [vmem:[%s1 + $0x68] sm:$0xff]
  %v47 = vld [vmem:[%s1 + $0x70] sm:$0xff]
  %v48 = vld [vmem:[%s1 + $0x78] sm:$0xff]
  %v49 = vld [vmem:[%s1 + $0x80] sm:$0xff]
  %v50 = vld [vmem:[%s1 + $0x88] sm:$0xff]
  %v51 = vld [vmem:[%s1 + $0x90] sm:$0xff]
  %v52 = vld [vmem:[%s1 + $0x98] sm:$0xff]
  %v53 = vld [vmem:[%s1 + $0xa0] sm:$0xff]
  %v54 = vld [vmem:[%s1 + $0xa8] sm:$0xff]
  %v55 = vld [vmem:[%s1 + $0xb0] sm:$0xff]
  %v56 = vld [vmem:[%s1 + $0xb8] sm:$0xff]
  %v57 = vld [vmem:[%s1 + $0xc0] sm:$0xff]
  %v58 = vld [vmem:[%s1 + $0xc8] sm:$0xff]
  %v59 = vld [vmem:[%s1 + $0xd0] sm:$0xff]
  %v60 = vld [vmem:[%s1 + $0xd8] sm:$0xff]
  %v61 = vld [vmem:[%s1 + $0xe0] sm:$0xff]
  %v62 = vld [vmem:[%s1 + $0xe8] sm:$0xff]
  %v63 = vld [vmem:[%s1 + $0xf0] sm:$0xff]
  %v64 = vld [vmem:[%s1 + $0xf8] sm:$0xff]
  %v66 = vlaneseq
  %v67 = vshrl.u32 %v66, 7
  %v68 = vsub.s32 0, %v67
  %v69 = vrot.slane %v32, %v68
  %v70 = vlaneseq
  %v71 = vshrl.u32 %v70, 7
  %v72 = vsub.s32 1, %v71
  %v73 = vrot.slane %v32, %v72
  %v78 = vunpack.c.l.b16 %v28
  %v79 = vunpack.c.h.b16 %v28
  %v80 = vunpack.c.l.b16 %v29
  %v81 = vunpack.c.h.b16 %v29
  %v82 = vpack.c.b16 %v80, %v78
  %v83 = vpack.c.b16 %v81, %v79
  %v118 = vunpack.c.l.b16 %v33
  %v119 = vunpack.c.h.b16 %v33
  %v120 = vunpack.c.l.b16 %v34
  %v121 = vunpack.c.h.b16 %v34
  %v122 = vunpack.c.l.b16 %v35
  %v123 = vunpack.c.h.b16 %v35
  %v124 = vunpack.c.l.b16 %v36
  %v125 = vunpack.c.h.b16 %v36
  %v126 = vunpack.c.l.b16 %v37
  %v127 = vunpack.c.h.b16 %v37
  %v128 = vunpack.c.l.b16 %v38
  %v129 = vunpack.c.h.b16 %v38
  %v130 = vunpack.c.l.b16 %v39
  %v131 = vunpack.c.h.b16 %v39
  %v132 = vunpack.c.l.b16 %v40
  %v133 = vunpack.c.h.b16 %v40
  %v134 = vunpack.c.l.b16 %v41
  %v135 = vunpack.c.h.b16 %v41
  %v136 = vunpack.c.l.b16 %v42
  %v137 = vunpack.c.h.b16 %v42
  %v138 = vunpack.c.l.b16 %v43
  %v139 = vunpack.c.h.b16 %v43
  %v140 = vunpack.c.l.b16 %v44
  %v141 = vunpack.c.h.b16 %v44
  %v142 = vunpack.c.l.b16 %v45
  %v143 = vunpack.c.h.b16 %v45
  %v144 = vunpack.c.l.b16 %v46
  %v145 = vunpack.c.h.b16 %v46
  %v146 = vunpack.c.l.b16 %v47
  %v147 = vunpack.c.h.b16 %v47
  %v148 = vunpack.c.l.b16 %v48
  %v149 = vunpack.c.h.b16 %v48
  %v150 = vunpack.c.l.b16 %v49
  %v151 = vunpack.c.h.b16 %v49
  %v152 = vunpack.c.l.b16 %v50
  %v153 = vunpack.c.h.b16 %v50
  %v154 = vunpack.c.l.b16 %v51
  %v155 = vunpack.c.h.b16 %v51
  %v156 = vunpack.c.l.b16 %v52
  %v157 = vunpack.c.h.b16 %v52
  %v158 = vunpack.c.l.b16 %v53
  %v159 = vunpack.c.h.b16 %v53
  %v160 = vunpack.c.l.b16 %v54
  %v161 = vunpack.c.h.b16 %v54
  %v162 = vunpack.c.l.b16 %v55
  %v163 = vunpack.c.h.b16 %v55
  %v164 = vunpack.c.l.b16 %v56
  %v165 = vunpack.c.h.b16 %v56
  %v166 = vunpack.c.l.b16 %v57
  %v167 = vunpack.c.h.b16 %v57
  %v168 = vunpack.c.l.b16 %v58
  %v169 = vunpack.c.h.b16 %v58
  %v170 = vunpack.c.l.b16 %v59
  %v171 = vunpack.c.h.b16 %v59
  %v172 = vunpack.c.l.b16 %v60
  %v173 = vunpack.c.h.b16 %v60
  %v174 = vunpack.c.l.b16 %v61
  %v175 = vunpack.c.h.b16 %v61
  %v176 = vunpack.c.l.b16 %v62
  %v177 = vunpack.c.h.b16 %v62
  %v178 = vunpack.c.l.b16 %v63
  %v179 = vunpack.c.h.b16 %v63
  %v180 = vunpack.c.l.b16 %v64
  %v181 = vunpack.c.h.b16 %v64
  %v182 = vpack.c.b16 %v120, %v118
  %v183 = vpack.c.b16 %v121, %v119
  %v184 = vpack.c.b16 %v124, %v122
  %v185 = vpack.c.b16 %v125, %v123
  %v186 = vpack.c.b16 %v128, %v126
  %v187 = vpack.c.b16 %v129, %v127
  %v188 = vpack.c.b16 %v132, %v130
  %v189 = vpack.c.b16 %v133, %v131
  %v190 = vpack.c.b16 %v136, %v134
  %v191 = vpack.c.b16 %v137, %v135
  %v192 = vpack.c.b16 %v140, %v138
  %v193 = vpack.c.b16 %v141, %v139
  %v194 = vpack.c.b16 %v144, %v142
  %v195 = vpack.c.b16 %v145, %v143
  %v196 = vpack.c.b16 %v148, %v146
  %v197 = vpack.c.b16 %v149, %v147
  %v198 = vpack.c.b16 %v152, %v150
  %v199 = vpack.c.b16 %v153, %v151
  %v200 = vpack.c.b16 %v156, %v154
  %v201 = vpack.c.b16 %v157, %v155
  %v202 = vpack.c.b16 %v160, %v158
  %v203 = vpack.c.b16 %v161, %v159
  %v204 = vpack.c.b16 %v164, %v162
  %v205 = vpack.c.b16 %v165, %v163
  %v206 = vpack.c.b16 %v168, %v166
  %v207 = vpack.c.b16 %v169, %v167
  %v208 = vpack.c.b16 %v172, %v170
  %v209 = vpack.c.b16 %v173, %v171
  %v210 = vpack.c.b16 %v176, %v174
  %v211 = vpack.c.b16 %v177, %v175
  %v212 = vpack.c.b16 %v180, %v178
  %v213 = vpack.c.b16 %v181, %v179
  %246 = vmatprep.subr.bf16.mxu0 %v183
  %247 = vmatpush1.bf16.msra.mxu0 %v182
  %248 = vmatprep.subr.bf16.mxu0 %v185
  %249 = vmatpush1.bf16.msra.mxu0 %v184
  %250 = vmatprep.subr.bf16.mxu0 %v187
  %251 = vmatpush1.bf16.msra.mxu0 %v186
  %252 = vmatprep.subr.bf16.mxu0 %v189
  %253 = vmatpush1.bf16.msra.mxu0 %v188
  %254 = vmatprep.subr.bf16.mxu0 %v191
  %255 = vmatpush1.bf16.msra.mxu0 %v190
  %256 = vmatprep.subr.bf16.mxu0 %v193
  %257 = vmatpush1.bf16.msra.mxu0 %v192
  %258 = vmatprep.subr.bf16.mxu0 %v195
  %259 = vmatpush1.bf16.msra.mxu0 %v194
  %260 = vmatprep.subr.bf16.mxu0 %v197
  %261 = vmatpush1.bf16.msra.mxu0 %v196
  %262 = vmatprep.subr.bf16.mxu0 %v199
  %263 = vmatpush1.bf16.msra.mxu0 %v198
  %264 = vmatprep.subr.bf16.mxu0 %v201
  %265 = vmatpush1.bf16.msra.mxu0 %v200
  %266 = vmatprep.subr.bf16.mxu0 %v203
  %267 = vmatpush1.bf16.msra.mxu0 %v202
  %268 = vmatprep.subr.bf16.mxu0 %v205
  %269 = vmatpush1.bf16.msra.mxu0 %v204
  %270 = vmatprep.subr.bf16.mxu0 %v207
  %271 = vmatpush1.bf16.msra.mxu0 %v206
  %272 = vmatprep.subr.bf16.mxu0 %v209
  %273 = vmatpush1.bf16.msra.mxu0 %v208
  %274 = vmatprep.subr.bf16.mxu0 %v211
  %275 = vmatpush1.bf16.msra.mxu0 %v210
  %276 = vmatprep.subr.bf16.mxu0 %v213
  %277 = vmatpush1.bf16.msra.mxu0 %v212
  %278 = vmatprep.mubr.bf16.mxu0 %v83
  %279 = vmatmul.mubr.bf16.gmra.mrb[0].mxu0 %v82
  %v280 = vpop.f32.mrb[0].mxu0
  %v281 = vadd.f32 %v69, %v280
  %v282 = vpop.f32.mrb[0].mxu0
  %v283 = vadd.f32 %v73, %v282
  %v284 = vpop.f32.mrb[0].mxu0
  %v285 = vadd.f32 %v69, %v284
  %v286 = vpop.f32.mrb[0].mxu0
  %v287 = vadd.f32 %v73, %v286
  %288 = vdwg.mxu0
  %v289 = vmul.f32 %v281, 0.5
  %v290 = vmul.f32 %v283, 0.5
  %v291 = vmul.f32 %v285, 0.5
  %v292 = vmul.f32 %v287, 0.5
  %v293 = vmul.f32 %v281, 0.70710677
  %v294 = vmul.f32 %v283, 0.70710677
  %v295 = vmul.f32 %v285, 0.70710677
  %v296 = vmul.f32 %v287, 0.70710677
  %v297 = verf.f32.pop %v293
  %v298 = verf.f32.pop %v294
  %v299 = verf.f32.pop %v295
  %v300 = verf.f32.pop %v296
  %v301 = vadd.f32 %v297, 1.0
  %v302 = vadd.f32 %v298, 1.0
  %v303 = vadd.f32 %v299, 1.0
  %v304 = vadd.f32 %v300, 1.0
  %v305 = vmul.f32 %v289, %v301
  %v306 = vmul.f32 %v290, %v302
  %v307 = vmul.f32 %v291, %v303
  %v308 = vmul.f32 %v292, %v304
  %v309 = vld [vmem:[#allocation2] sm:$0xff]
  %v310 = vld [vmem:[#allocation2 + $0x8] sm:$0xff]
  %v311 = vld [vmem:[#allocation2 + $0x10] sm:$0xff]
  %v312 = vld [vmem:[#allocation2 + $0x18] sm:$0xff]
  %v313 = vpack.c.bf16 %v307, %v305
  %v314 = vpack.c.bf16 %v308, %v306
  %v315 = vld [vmem:[%s3] sm:$0xff]
  %v316 = vld [vmem:[%s3 + $0x8] sm:$0xff]
  %v317 = vld [vmem:[%s3 + $0x10] sm:$0xff]
  %v318 = vld [vmem:[%s3 + $0x18] sm:$0xff]
  %v319 = vld [vmem:[%s3 + $0x20] sm:$0xff]
  %v320 = vld [vmem:[%s3 + $0x28] sm:$0xff]
  %v321 = vld [vmem:[%s3 + $0x30] sm:$0xff]
  %v322 = vld [vmem:[%s3 + $0x38] sm:$0xff]
  %v323 = vld [vmem:[%s3 + $0x40] sm:$0xff]
  %v324 = vld [vmem:[%s3 + $0x48] sm:$0xff]
  %v325 = vld [vmem:[%s3 + $0x50] sm:$0xff]
  %v326 = vld [vmem:[%s3 + $0x58] sm:$0xff]
  %v327 = vld [vmem:[%s3 + $0x60] sm:$0xff]
  %v328 = vld [vmem:[%s3 + $0x68] sm:$0xff]
  %v329 = vld [vmem:[%s3 + $0x70] sm:$0xff]
  %v330 = vld [vmem:[%s3 + $0x78] sm:$0xff]
  %v331 = vld [vmem:[%s3 + $0x80] sm:$0xff]
  %v332 = vld [vmem:[%s3 + $0x88] sm:$0xff]
  %v333 = vld [vmem:[%s3 + $0x90] sm:$0xff]
  %v334 = vld [vmem:[%s3 + $0x98] sm:$0xff]
  %v335 = vld [vmem:[%s3 + $0xa0] sm:$0xff]
  %v336 = vld [vmem:[%s3 + $0xa8] sm:$0xff]
  %v337 = vld [vmem:[%s3 + $0xb0] sm:$0xff]
  %v338 = vld [vmem:[%s3 + $0xb8] sm:$0xff]
  %v339 = vld [vmem:[%s3 + $0xc0] sm:$0xff]
  %v340 = vld [vmem:[%s3 + $0xc8] sm:$0xff]
  %v341 = vld [vmem:[%s3 + $0xd0] sm:$0xff]
  %v342 = vld [vmem:[%s3 + $0xd8] sm:$0xff]
  %v343 = vld [vmem:[%s3 + $0xe0] sm:$0xff]
  %v344 = vld [vmem:[%s3 + $0xe8] sm:$0xff]
  %v345 = vld [vmem:[%s3 + $0xf0] sm:$0xff]
  %v346 = vld [vmem:[%s3 + $0xf8] sm:$0xff]
  %v379 = vunpack.c.l.b16 %v315
  %v380 = vunpack.c.h.b16 %v315
  %v381 = vunpack.c.l.b16 %v316
  %v382 = vunpack.c.h.b16 %v316
  %v383 = vunpack.c.l.b16 %v317
  %v384 = vunpack.c.h.b16 %v317
  %v385 = vunpack.c.l.b16 %v318
  %v386 = vunpack.c.h.b16 %v318
  %v387 = vunpack.c.l.b16 %v319
  %v388 = vunpack.c.h.b16 %v319
  %v389 = vunpack.c.l.b16 %v320
  %v390 = vunpack.c.h.b16 %v320
  %v391 = vunpack.c.l.b16 %v321
  %v392 = vunpack.c.h.b16 %v321
  %v393 = vunpack.c.l.b16 %v322
  %v394 = vunpack.c.h.b16 %v322
  %v395 = vunpack.c.l.b16 %v323
  %v396 = vunpack.c.h.b16 %v323
  %v397 = vunpack.c.l.b16 %v324
  %v398 = vunpack.c.h.b16 %v324
  %v399 = vunpack.c.l.b16 %v325
  %v400 = vunpack.c.h.b16 %v325
  %v401 = vunpack.c.l.b16 %v326
  %v402 = vunpack.c.h.b16 %v326
  %v403 = vunpack.c.l.b16 %v327
  %v404 = vunpack.c.h.b16 %v327
  %v405 = vunpack.c.l.b16 %v328
  %v406 = vunpack.c.h.b16 %v328
  %v407 = vunpack.c.l.b16 %v329
  %v408 = vunpack.c.h.b16 %v329
  %v409 = vunpack.c.l.b16 %v330
  %v410 = vunpack.c.h.b16 %v330
  %v411 = vunpack.c.l.b16 %v331
  %v412 = vunpack.c.h.b16 %v331
  %v413 = vunpack.c.l.b16 %v332
  %v414 = vunpack.c.h.b16 %v332
  %v415 = vunpack.c.l.b16 %v333
  %v416 = vunpack.c.h.b16 %v333
  %v417 = vunpack.c.l.b16 %v334
  %v418 = vunpack.c.h.b16 %v334
  %v419 = vunpack.c.l.b16 %v335
  %v420 = vunpack.c.h.b16 %v335
  %v421 = vunpack.c.l.b16 %v336
  %v422 = vunpack.c.h.b16 %v336
  %v423 = vunpack.c.l.b16 %v337
  %v424 = vunpack.c.h.b16 %v337
  %v425 = vunpack.c.l.b16 %v338
  %v426 = vunpack.c.h.b16 %v338
  %v427 = vunpack.c.l.b16 %v339
  %v428 = vunpack.c.h.b16 %v339
  %v429 = vunpack.c.l.b16 %v340
  %v430 = vunpack.c.h.b16 %v340
  %v431 = vunpack.c.l.b16 %v341
  %v432 = vunpack.c.h.b16 %v341
  %v433 = vunpack.c.l.b16 %v342
  %v434 = vunpack.c.h.b16 %v342
  %v435 = vunpack.c.l.b16 %v343
  %v436 = vunpack.c.h.b16 %v343
  %v437 = vunpack.c.l.b16 %v344
  %v438 = vunpack.c.h.b16 %v344
  %v439 = vunpack.c.l.b16 %v345
  %v440 = vunpack.c.h.b16 %v345
  %v441 = vunpack.c.l.b16 %v346
  %v442 = vunpack.c.h.b16 %v346
  %v443 = vpack.c.b16 %v381, %v379
  %v444 = vpack.c.b16 %v382, %v380
  %v445 = vpack.c.b16 %v385, %v383
  %v446 = vpack.c.b16 %v386, %v384
  %v447 = vpack.c.b16 %v389, %v387
  %v448 = vpack.c.b16 %v390, %v388
  %v449 = vpack.c.b16 %v393, %v391
  %v450 = vpack.c.b16 %v394, %v392
  %v451 = vpack.c.b16 %v397, %v395
  %v452 = vpack.c.b16 %v398, %v396
  %v453 = vpack.c.b16 %v401, %v399
  %v454 = vpack.c.b16 %v402, %v400
  %v455 = vpack.c.b16 %v405, %v403
  %v456 = vpack.c.b16 %v406, %v404
  %v457 = vpack.c.b16 %v409, %v407
  %v458 = vpack.c.b16 %v410, %v408
  %v459 = vpack.c.b16 %v413, %v411
  %v460 = vpack.c.b16 %v414, %v412
  %v461 = vpack.c.b16 %v417, %v415
  %v462 = vpack.c.b16 %v418, %v416
  %v463 = vpack.c.b16 %v421, %v419
  %v464 = vpack.c.b16 %v422, %v420
  %v465 = vpack.c.b16 %v425, %v423
  %v466 = vpack.c.b16 %v426, %v424
  %v467 = vpack.c.b16 %v429, %v427
  %v468 = vpack.c.b16 %v430, %v428
  %v469 = vpack.c.b16 %v433, %v431
  %v470 = vpack.c.b16 %v434, %v432
  %v471 = vpack.c.b16 %v437, %v435
  %v472 = vpack.c.b16 %v438, %v436
  %v473 = vpack.c.b16 %v441, %v439
  %v474 = vpack.c.b16 %v442, %v440
  %507 = vmatprep.subr.bf16.mxu0 %v444
  %508 = vmatpush1.bf16.msra.mxu0 %v443
  %509 = vmatprep.subr.bf16.mxu0 %v446
  %510 = vmatpush1.bf16.msra.mxu0 %v445
  %511 = vmatprep.subr.bf16.mxu0 %v448
  %512 = vmatpush1.bf16.msra.mxu0 %v447
  %513 = vmatprep.subr.bf16.mxu0 %v450
  %514 = vmatpush1.bf16.msra.mxu0 %v449
  %515 = vmatprep.subr.bf16.mxu0 %v452
  %516 = vmatpush1.bf16.msra.mxu0 %v451
  %517 = vmatprep.subr.bf16.mxu0 %v454
  %518 = vmatpush1.bf16.msra.mxu0 %v453
  %519 = vmatprep.subr.bf16.mxu0 %v456
  %520 = vmatpush1.bf16.msra.mxu0 %v455
  %521 = vmatprep.subr.bf16.mxu0 %v458
  %522 = vmatpush1.bf16.msra.mxu0 %v457
  %523 = vmatprep.subr.bf16.mxu0 %v460
  %524 = vmatpush1.bf16.msra.mxu0 %v459
  %525 = vmatprep.subr.bf16.mxu0 %v462
  %526 = vmatpush1.bf16.msra.mxu0 %v461
  %527 = vmatprep.subr.bf16.mxu0 %v464
  %528 = vmatpush1.bf16.msra.mxu0 %v463
  %529 = vmatprep.subr.bf16.mxu0 %v466
  %530 = vmatpush1.bf16.msra.mxu0 %v465
  %531 = vmatprep.subr.bf16.mxu0 %v468
  %532 = vmatpush1.bf16.msra.mxu0 %v467
  %533 = vmatprep.subr.bf16.mxu0 %v470
  %534 = vmatpush1.bf16.msra.mxu0 %v469
  %535 = vmatprep.subr.bf16.mxu0 %v472
  %536 = vmatpush1.bf16.msra.mxu0 %v471
  %537 = vmatprep.subr.bf16.mxu0 %v474
  %538 = vmatpush1.bf16.msra.mxu0 %v473
  %539 = vmatprep.mubr.bf16.mxu0 %v314
  %540 = vmatmul.mubr.bf16.gmra.mrb[0].mxu0 %v313
  %v541 = vpop.f32.mrb[0].mxu0
  %v542 = vadd.f32 0.0, %v541
  %v543 = vpop.f32.mrb[0].mxu0
  %v544 = vadd.f32 0.0, %v543
  %v545 = vpop.f32.mrb[0].mxu0
  %v546 = vadd.f32 0.0, %v545
  %v547 = vpop.f32.mrb[0].mxu0
  %v548 = vadd.f32 0.0, %v547
  %549 = vdwg.mxu0
  %v550 = vadd.f32 %v309, %v542
  %v551 = vadd.f32 %v310, %v544
  %v552 = vadd.f32 %v311, %v546
  %v553 = vadd.f32 %v312, %v548
  %554 = vst [vmem:[#allocation2] sm:$0xff] %v550
  %555 = vst [vmem:[#allocation2 + $0x8] sm:$0xff] %v551
  %556 = vst [vmem:[#allocation2 + $0x10] sm:$0xff] %v552
  %557 = vst [vmem:[#allocation2 + $0x18] sm:$0xff] %v553
  // Predicated region
  $region26: #{apply.1} parent=0 // pred_check
    %p558 = pneg %p20
  $region27: #{apply.1} parent=0 // pred_check_branch
    %560 = sbr.rel (%p558) target = $region29
  $region28: #{apply.1} parent=0 // pred_region
    %v561 = vld [vmem:[#allocation2] sm:$0xff]
    %v562 = vld [vmem:[#allocation2 + $0x8] sm:$0xff]
    %v563 = vld [vmem:[#allocation2 + $0x10] sm:$0xff]
    %v564 = vld [vmem:[#allocation2 + $0x18] sm:$0xff]
    %v565 = vld [vmem:[%s4] sm:$0x3]
    %v567 = vlaneseq
    %v568 = vshrl.u32 %v567, 7
    %v569 = vsub.s32 0, %v568
    %v570 = vrot.slane %v565, %v569
    %v571 = vlaneseq
    %v572 = vshrl.u32 %v571, 7
    %v573 = vsub.s32 1, %v572
    %v574 = vrot.slane %v565, %v573
    %v577 = vadd.f32 %v561, %v570
    %v578 = vadd.f32 %v562, %v574
    %v579 = vadd.f32 %v563, %v570
    %v580 = vadd.f32 %v564, %v574
    %581 = vst [vmem:[%s5] sm:$0xff] %v577
    %582 = vst [vmem:[%s5 + $0x8] sm:$0xff] %v578
    %583 = vst [vmem:[%s5 + $0x10] sm:$0xff] %v579
    %584 = vst [vmem:[%s5 + $0x18] sm:$0xff] %v580
  $region29: #{apply.1} parent=0 // pred_fallthru
    _
  // Predicated region
  $region30: #{apply.1} parent=0 // pred_check
    _
  $region31: #{apply.1} parent=0 // pred_check_branch
    %586 = sbr.rel (0) target = $region33
  $region32: #{apply.1} parent=0 // pred_region
    _
  $region33: #{apply.1} parent=0 // pred_fallthru
    _
  // Predicated region
  $region34: #{apply.1} parent=0 // pred_check
    _
  $region35: #{apply.1} parent=0 // pred_check_branch
    %588 = sbr.rel (0) target = $region37
  $region36: #{apply.1} parent=0 // pred_region
    _
  $region37: #{apply.1} parent=0 // pred_fallthru
    _

</llo_original>
